<compile_context>
chip_gen: v6e
topology: v6e:2x2x1
jax: 0.10.0
libtpu: 0.0.40
codegen_flags: <defaults>
</compile_context>

<pallas_src>
import functools
import math

import jax
import jax.numpy as jnp
from jax import lax
from jax.experimental import pallas as pl
from jax.experimental.pallas import tpu as pltpu

# ---- AdaptiveHeatmapLoss constants (module defaults) ----
KEYPOINT_WEIGHT = 50.0
BACKGROUND_WEIGHT = 1.0
FOCAL_ALPHA = 2.0  # focal_alpha = 2.0 -> (1 - pt)^2  (square hard-coded below)

# ---- SpatialCoordinateLoss constants (module defaults) ----
PIXEL_WEIGHT_SCALE = 100.0
DISTANCE_THRESHOLD = 5.0

# ---- DynamicLossBalancer initial weights (first forward call: unchanged) ----
INITIAL_WEIGHTS = {"heatmap": 1.0, "coordinate": 5.0, "visibility": 1.0}

# ---- adaptive threshold clamp bounds ----
EDGE_LO, EDGE_HI = 0.05, 0.3

_MIB = 1024 * 1024


def _vmem_capacity_bytes():
    try:
        return int(pltpu.get_tpu_info().vmem_capacity_bytes)
    except Exception:
        return 64 * _MIB          # conservative (v7x-sized) fallback


_VMEM_CAP = _vmem_capacity_bytes()                       # 128 MiB v5e/v6e, 64 MiB v7x
_VMEM_LIMIT = max(32 * _MIB, min(_VMEM_CAP - 16 * _MIB, 96 * _MIB))
_HM_BLOCK_BUDGET = max(16 * _MIB, _VMEM_LIMIT - 16 * _MIB)   # double-buffered pred+gt

_MAX_TILE_ROWS = 4096             # generous row cap (old cap of 512 lifted)
_SLAB_TARGET_ELEMS = 128 * 1024   # ~512 KiB f32 of work per in-kernel row chunk
_STATIC_UNROLL_MAX = 16           # unroll the slab loop statically up to this
_TW_RESIDENT_MAX_ROWS = 4096      # keep target_weight resident if bk_pad small


def _round_up(x, m):
    return ((x + m - 1) // m) * m


def _heatmap_tiling(bk, hw_pad, pred_itemsize, gt_itemsize):
    """Pick the DMA tile (rows) so double-buffered pred+gt blocks fit the VMEM
    budget on every generation, with an even tile count so the grid splits
    2-way across v7x's TensorCores; slab = in-kernel row chunk that bounds the
    f32 temporaries independently of the DMA tile size."""
    per_row = hw_pad * (pred_itemsize + gt_itemsize) * 2    # x2: double-buffered
    cap = (_HM_BLOCK_BUDGET // per_row) // 8 * 8
    cap = max(8, min(cap, _MAX_TILE_ROWS))
    t_total = 2 * pl.cdiv(bk, 2 * cap)                      # even tile count
    tile_m = min(cap, _round_up(pl.cdiv(bk, t_total), 8))
    bk_pad = t_total * tile_m
    slab = min(tile_m, _round_up(max(_SLAB_TARGET_ELEMS // hw_pad, 8), 8), 256)
    return tile_m, slab, t_total, bk_pad


# ----------------------------------------------------------------------------
# Kernel 1: two-edge cumulative counts for the adaptive-threshold fast path.
# Per-lane (8, hw) f32 accumulation only (pure VALU compare + add); the tiny
# cross-lane reduction happens once in the JAX epilogue.
# ----------------------------------------------------------------------------
def _edge_count_kernel(gt_ref, out_ref, *, tile_m, slab):
    i = pl.program_id(1)

    @pl.when(i == 0)
    def _init():
        out_ref[...] = jnp.zeros_like(out_ref)

    hw = gt_ref.shape[1]

    def fold(start, size):
        g = gt_ref[pl.ds(start, size), :].astype(jnp.float32)
        lo = (g <= EDGE_LO).astype(jnp.float32).reshape(size // 8, 8, hw).sum(axis=0)
        hi = (g <= EDGE_HI).astype(jnp.float32).reshape(size // 8, 8, hw).sum(axis=0)
        out_ref[0, 0] += lo
        out_ref[0, 1] += hi

    n_full = tile_m // slab
    tail = tile_m - n_full * slab
    if n_full <= _STATIC_UNROLL_MAX:
        for s in range(n_full):
            fold(s * slab, slab)
    else:
        @pl.loop(0, n_full)
        def _(s):
            fold(pl.multiple_of(s * slab, 8), slab)
    if tail:
        fold(n_full * slab, tail)


# ----------------------------------------------------------------------------
# Kernel 2: adaptive heatmap loss (masked + focal-weighted MSE, tiled reduce).
# Row-slab chunking keeps f32 temporaries ~512 KiB regardless of DMA tile size.
# ----------------------------------------------------------------------------
def _heatmap_loss_kernel(thr_ref, pred_ref, gt_ref, tw_ref, out_ref, *,
                         tile_m, slab, t_half, tw_absolute):
    p = pl.program_id(0)
    i = pl.program_id(1)

    @pl.when(i == 0)
    def _init():
        out_ref[...] = jnp.zeros_like(out_ref)

    thr = thr_ref[0, 0]
    hw = pred_ref.shape[1]
    row0 = (p * t_half + i) * tile_m if tw_absolute else 0

    def fold(start, size):
        pred = pred_ref[pl.ds(start, size), :].astype(jnp.float32)
        gt = gt_ref[pl.ds(start, size), :].astype(jnp.float32)
        tw_start = row0 + start
        if tw_absolute:
            tw_start = pl.multiple_of(tw_start, 8)
        tw = tw_ref[pl.ds(tw_start, size), :]                 # (size, 1)

        diff = pred - gt
        mse = diff * diff
        region_w = jnp.where(gt > thr, KEYPOINT_WEIGHT, BACKGROUND_WEIGHT)
        # matches torch exactly: pt = exp(-mse); focal = (1 - pt) ** 2
        one_minus_pt = 1.0 - jnp.exp(-mse)
        contrib = (mse * region_w) * (one_minus_pt * one_minus_pt) * tw
        # fold sublane-blocks with pure vector adds; no cross-lane reduce here
        out_ref[0] += contrib.reshape(size // 8, 8, hw).sum(axis=0)

    n_full = tile_m // slab
    tail = tile_m - n_full * slab
    if n_full <= _STATIC_UNROLL_MAX:
        for s in range(n_full):
            fold(s * slab, slab)
    else:
        @pl.loop(0, n_full)
        def _(s):
            fold(pl.multiple_of(s * slab, 8), slab)
    if tail:
        fold(n_full * slab, tail)


def heatmap_loss(pred_hm, gt_hm, target_weight):
    B, K, H, W = pred_hm.shape
    bk, hw = B * K, H * W
    hw_pad = _round_up(hw, 128)
    tile_m, slab, t_total, bk_pad = _heatmap_tiling(
        bk, hw_pad, pred_hm.dtype.itemsize, gt_hm.dtype.itemsize)
    t_half = t_total // 2

    pred2d = pred_hm.reshape(bk, hw)
    gt2d = gt_hm.reshape(bk, hw)
    if (bk_pad, hw_pad) != (bk, hw):
        # TODO(synk): in-kernel masked remainder tiles would avoid this copy.
        pred2d = jnp.pad(pred2d, ((0, bk_pad - bk), (0, hw_pad - hw)))
        gt2d = jnp.pad(gt2d, ((0, bk_pad - bk), (0, hw_pad - hw)))
    tw_col = jnp.pad(target_weight.reshape(bk, 1).astype(jnp.float32),
                     ((0, bk_pad - bk), (0, 0)))

    row_map = lambda p, i: (p * t_half + i, 0)

    # ---- pass 1: two-edge counts (megacore-split, per-lane accumulation) ----
    count_partials = pl.pallas_call(
        functools.partial(_edge_count_kernel, tile_m=tile_m, slab=slab),
        out_shape=jax.ShapeDtypeStruct((2, 2, 8, hw_pad), jnp.float32),
        grid=(2, t_half),
        in_specs=[pl.BlockSpec((tile_m, hw_pad), row_map)],
        out_specs=pl.BlockSpec((1, 2, 8, hw_pad), lambda p, i: (p, 0, 0, 0)),
        compiler_params=pltpu.CompilerParams(
            dimension_semantics=("parallel", "arbitrary"),
            vmem_limit_bytes=_VMEM_LIMIT),
    )(gt2d)
    counts = jnp.sum(count_partials.astype(jnp.int32), axis=(0, 2, 3))
    n_pad = bk_pad * hw_pad - bk * hw
    c_lo = counts[0] - n_pad              # padded zeros sit below both edges
    c_hi = counts[1] - n_pad

    # ---- adaptive 0.9-quantile threshold, clamped to [0.05, 0.3] ----
    n = bk * hw
    rank = 0.9 * (n - 1)                              # torch 'linear' virtual index
    clamps_lo = c_lo >= (math.ceil(rank) + 1)         # quantile guaranteed <= 0.05
    clamps_hi = c_hi <= math.floor(rank)              # quantile guaranteed >= 0.3
    gt_flat = gt_hm.reshape(-1).astype(jnp.float32)
    thr = lax.cond(
        jnp.logical_or(clamps_lo, clamps_hi),
        lambda: jnp.where(clamps_lo, jnp.float32(EDGE_LO), jnp.float32(EDGE_HI)),
        # rare un-clamped case: exact quantile (device sort) under lax.cond
        lambda: jnp.clip(jnp.quantile(gt_flat, 0.9),
                         EDGE_LO, EDGE_HI).astype(jnp.float32),
    )
    thr2d = thr.reshape(1, 1)

    # ---- pass 2: tiled masked/focal MSE reduction ----
    tw_absolute = bk_pad <= _TW_RESIDENT_MAX_ROWS
    tw_spec = (pl.BlockSpec((bk_pad, 1), lambda p, i: (0, 0)) if tw_absolute
               else pl.BlockSpec((tile_m, 1), row_map))
    partials = pl.pallas_call(
        functools.partial(_heatmap_loss_kernel, tile_m=tile_m, slab=slab,
                          t_half=t_half, tw_absolute=tw_absolute),
        out_shape=jax.ShapeDtypeStruct((2, 8, hw_pad), jnp.float32),
        grid=(2, t_half),
        in_specs=[
            pl.BlockSpec(memory_space=pltpu.MemorySpace.SMEM),   # threshold
            pl.BlockSpec((tile_m, hw_pad), row_map),             # pred
            pl.BlockSpec((tile_m, hw_pad), row_map),             # gt
            tw_spec,                                             # target_weight
        ],
        out_specs=pl.BlockSpec((1, 8, hw_pad), lambda p, i: (p, 0, 0)),
        compiler_params=pltpu.CompilerParams(
            dimension_semantics=("parallel", "arbitrary"),
            vmem_limit_bytes=_VMEM_LIMIT),
    )(thr2d, pred2d, gt2d, tw_col)

    # zero-padded rows/lanes contribute exactly 0 -> divide by the real count
    return jnp.sum(partials) / float(bk * hw)          # == weighted_loss.mean()


# ----------------------------------------------------------------------------
# Kernel 3: fused coordinate (smooth-L1 + distance weighting) + visibility CE.
# One stacked (5, R, 128) plane input + (C, R, 128) logits; labels and the
# validity mask are derived in-kernel (cast / 2-D iota) -> single tiny launch.
# ----------------------------------------------------------------------------
def _coord_vis_kernel(planes_ref, logits_ref, out_ref, *, n_real):
    px = planes_ref[0]
    py = planes_ref[1]
    gx = planes_ref[2]
    gy = planes_ref[3]
    vis = planes_ref[4]
    r, lanes = px.shape

    idx = (lax.broadcasted_iota(jnp.int32, (r, lanes), 0) * lanes
           + lax.broadcasted_iota(jnp.int32, (r, lanes), 1))
    valid = (idx < n_real).astype(jnp.float32)

    # ---- SpatialCoordinateLoss ----
    dx = px - gx
    dy = py - gy
    adx = jnp.abs(dx)
    ady = jnp.abs(dy)
    sl1 = (jnp.where(adx < 1.0, 0.5 * dx * dx, adx - 0.5)
           + jnp.where(ady < 1.0, 0.5 * dy * dy, ady - 0.5))
    vmask = (vis > 0.0).astype(jnp.float32)          # padding has vis == 0
    dist = jnp.sqrt(dx * dx + dy * dy)
    dw = jnp.clip(dist * (1.0 / DISTANCE_THRESHOLD), 1.0, 3.0)
    coord = sl1 * vmask * dw * PIXEL_WEIGHT_SCALE
    out_ref[0, 0] = jnp.sum(coord)
    out_ref[0, 1] = jnp.sum(vmask)

    # ---- visibility CrossEntropy (per-class planes, pure VPU/EUP) ----
    C = logits_ref.shape[0]
    labels = vis.astype(jnp.int32)        # matches torch .long() for ints >= 0
    planes = [logits_ref[c] for c in range(C)]
    mx = planes[0]
    for c in range(1, C):
        mx = jnp.maximum(mx, planes[c])
    se = jnp.zeros_like(mx)
    picked = jnp.zeros_like(mx)
    for c in range(C):
        se = se + jnp.exp(planes[c] - mx)
        picked = picked + planes[c] * (labels == c).astype(jnp.float32)
    ce = (mx + jnp.log(se) - picked) * valid          # mask out padding
    out_ref[0, 2] = jnp.sum(ce)
    out_ref[0, 3] = 0.0


def coord_and_visibility_losses(pred_coords, gt_coords, visibility,
                                pred_visibility):
    B, N, K, _ = pred_coords.shape
    C = pred_visibility.shape[-1]
    m = B * N * K
    r = _round_up(max(1, pl.cdiv(m, 128)), 8)
    m_pad = r * 128

    def plane(x):
        flat = x.reshape(m).astype(jnp.float32)
        return jnp.pad(flat, (0, m_pad - m)).reshape(r, 128)

    planes = jnp.stack([plane(pred_coords[..., 0]), plane(pred_coords[..., 1]),
                        plane(gt_coords[..., 0]), plane(gt_coords[..., 1]),
                        plane(visibility)], axis=0)                 # (5, r, 128)
    logits = pred_visibility.reshape(m, C).astype(jnp.float32)
    logits = jnp.pad(logits, ((0, m_pad - m), (0, 0))).T.reshape(C, r, 128)

    sums = pl.pallas_call(
        functools.partial(_coord_vis_kernel, n_real=m),
        out_shape=jax.ShapeDtypeStruct((1, 4), jnp.float32),
        in_specs=[pl.BlockSpec(memory_space=pltpu.MemorySpace.VMEM)] * 2,
        out_specs=pl.BlockSpec(memory_space=pltpu.MemorySpace.SMEM),
        compiler_params=pltpu.CompilerParams(vmem_limit_bytes=_VMEM_LIMIT),
    )(planes, logits)

    # visible_mask.sum() == 0 -> 0 / 1e-8 == 0, matching the torch early-return
    coord_loss = sums[0, 0] / (sums[0, 1] + 1e-8)
    vis_loss = sums[0, 2] / float(m)                 # CrossEntropyLoss 'mean'
    return coord_loss, vis_loss


# ----------------------------------------------------------------------------
# ImprovedKeypointLoss.forward equivalent
# ----------------------------------------------------------------------------
def improved_keypoint_loss(predictions, targets):
    # First forward call: DynamicLossBalancer leaves initial weights untouched.
    weights = dict(INITIAL_WEIGHTS)

    hm = heatmap_loss(predictions["heatmaps"], targets["heatmaps"],
                      targets["target_weight"])
    coord, vis = coord_and_visibility_losses(
        predictions["keypoints"], targets["keypoints"],
        targets["visibilities"], predictions["visibility"])

    total = (weights["heatmap"] * hm
             + weights["coordinate"] * coord
             + weights["visibility"] * vis)

    loss_dict = {
        "keypoint_loss": hm,
        "heatmap_loss": hm,
        "visibility_loss": vis,
        "coordinate_loss": coord,
        "total_loss": total,
        "loss_weights": weights,
    }
    return total, loss_dict


if __name__ == "__main__":
    key = jax.random.PRNGKey(0)
    B, K, H, W = 2, 8, 16, 16     # batch, keypoints, heatmap spatial
    N = 1                         # instances per image
    C = 3                         # visibility classes

    ks = jax.random.split(key, 6)
    pred_hm = jax.random.normal(ks[0], (B, K, H, W), jnp.float32) * 0.1
    gt_hm = jax.nn.sigmoid(jax.random.normal(ks[1], (B, K, H, W), jnp.float32))
    target_weight = jnp.ones((B, K), jnp.float32)
    pred_coords = jax.random.uniform(ks[2], (B, N, K, 2), jnp.float32) * 16.0
    gt_coords = jax.random.uniform(ks[3], (B, N, K, 2), jnp.float32) * 16.0
    gt_vis = jax.random.randint(ks[4], (B, N, K), 0, C).astype(jnp.float32)
    pred_vis = jax.random.normal(ks[5], (B, N, K, C), jnp.float32)

    predictions = {"heatmaps": pred_hm, "keypoints": pred_coords,
                   "visibility": pred_vis}
    targets = {"heatmaps": gt_hm, "keypoints": gt_coords,
               "visibilities": gt_vis, "target_weight": target_weight}

    total_loss, loss_dict = improved_keypoint_loss(predictions, targets)
    jax.block_until_ready(total_loss)
    assert jnp.isfinite(total_loss)
    print("KERNEL_OK")
</pallas_src>

<mosaic_0001>
module attributes {stable_mosaic.version = 11 : i64} {
  func.func @_edge_count_kernel(%arg0: i32, %arg1: i32, %arg2: memref<8x256xf32, #tpu.memory_space<vmem>>, %arg3: memref<1x2x8x256xf32, #tpu.memory_space<vmem>>) attributes {dimension_semantics = [#tpu.dimension_semantics<parallel>, #tpu.dimension_semantics<arbitrary>], iteration_bounds = array<i64: 2, 1>, scalar_prefetch = 0 : i64, scratch_operands = 0 : i64, tpu.core_type = #tpu.core_type<tc>, window_params = [{transform_indices = @transform_0, window_bounds = array<i64: 8, 256>}, {transform_indices = @transform_1, window_bounds = array<i64: 1, 2, 8, 256>}]} {
    %c0_i32 = arith.constant 0 : i32
    %0 = arith.cmpi eq, %arg1, %c0_i32 : i32
    %1 = arith.extui %0 : i1 to i32
    %c0_i32_0 = arith.constant 0 : i32
    %2 = arith.cmpi ne, %1, %c0_i32_0 : i32
    scf.if %2 {
      %cst_20 = arith.constant 0.000000e+00 : f32
      %28 = vector.broadcast %cst_20 : f32 to vector<1x2x8x256xf32>
      %c0_21 = arith.constant 0 : index
      %c0_22 = arith.constant 0 : index
      %c0_23 = arith.constant 0 : index
      %c0_24 = arith.constant 0 : index
      %29 = vector.load %arg3[%c0_21, %c0_22, %c0_23, %c0_24] : memref<1x2x8x256xf32, #tpu.memory_space<vmem>>, vector<1x2x8x256xf32>
      tpu.vector_store %arg3[%c0_21, %c0_22, %c0_23, %c0_24], %28 {strides = array<i32>} : memref<1x2x8x256xf32, #tpu.memory_space<vmem>>, vector<1x2x8x256xf32>,
    } else {
    }
    %c0 = arith.constant 0 : index
    %c0_1 = arith.constant 0 : index
    %3 = vector.load %arg2[%c0, %c0_1] : memref<8x256xf32, #tpu.memory_space<vmem>>, vector<8x256xf32>
    %cst = arith.constant 5.000000e-02 : f32
    %4 = vector.broadcast %cst : f32 to vector<8x256xf32>
    %5 = arith.cmpf ole, %3, %4 : vector<8x256xf32>
    %6 = arith.extui %5 : vector<8x256xi1> to vector<8x256xi32>
    %7 = arith.sitofp %6 : vector<8x256xi32> to vector<8x256xf32>
    %8 = vector.shape_cast %7 : vector<8x256xf32> to vector<1x8x256xf32>
    %cst_2 = arith.constant dense<0.000000e+00> : vector<8x256xf32>
    %9 = vector.multi_reduction <add>, %8, %cst_2 [0] : vector<1x8x256xf32> to vector<8x256xf32>
    %cst_3 = arith.constant 3.000000e-01 : f32
    %10 = vector.broadcast %cst_3 : f32 to vector<8x256xf32>
    %11 = arith.cmpf ole, %3, %10 : vector<8x256xf32>
    %12 = arith.extui %11 : vector<8x256xi1> to vector<8x256xi32>
    %13 = arith.sitofp %12 : vector<8x256xi32> to vector<8x256xf32>
    %14 = vector.shape_cast %13 : vector<8x256xf32> to vector<1x8x256xf32>
    %cst_4 = arith.constant dense<0.000000e+00> : vector<8x256xf32>
    %15 = vector.multi_reduction <add>, %14, %cst_4 [0] : vector<1x8x256xf32> to vector<8x256xf32>
    %c0_5 = arith.constant 0 : index
    %c0_6 = arith.constant 0 : index
    %c0_7 = arith.constant 0 : index
    %c0_8 = arith.constant 0 : index
    %16 = vector.load %arg3[%c0_5, %c0_6, %c0_7, %c0_8] : memref<1x2x8x256xf32, #tpu.memory_space<vmem>>, vector<1x1x8x256xf32>
    %17 = vector.shape_cast %16 : vector<1x1x8x256xf32> to vector<8x256xf32>
    %18 = arith.addf %17, %9 : vector<8x256xf32>
    %c0_9 = arith.constant 0 : index
    %c0_10 = arith.constant 0 : index
    %c0_11 = arith.constant 0 : index
    %c0_12 = arith.constant 0 : index
    %19 = vector.load %arg3[%c0_9, %c0_10, %c0_11, %c0_12] : memref<1x2x8x256xf32, #tpu.memory_space<vmem>>, vector<1x1x8x256xf32>
    %20 = vector.shape_cast %19 : vector<1x1x8x256xf32> to vector<8x256xf32>
    %21 = vector.shape_cast %18 : vector<8x256xf32> to vector<1x1x8x256xf32>
    tpu.vector_store %arg3[%c0_9, %c0_10, %c0_11, %c0_12], %21 {strides = array<i32>} : memref<1x2x8x256xf32, #tpu.memory_space<vmem>>, vector<1x1x8x256xf32>,
    %c0_13 = arith.constant 0 : index
    %c1 = arith.constant 1 : index
    %c0_14 = arith.constant 0 : index
    %c0_15 = arith.constant 0 : index
    %22 = vector.load %arg3[%c0_13, %c1, %c0_14, %c0_15] : memref<1x2x8x256xf32, #tpu.memory_space<vmem>>, vector<1x1x8x256xf32>
    %23 = vector.shape_cast %22 : vector<1x1x8x256xf32> to vector<8x256xf32>
    %24 = arith.addf %23, %15 : vector<8x256xf32>
    %c0_16 = arith.constant 0 : index
    %c1_17 = arith.constant 1 : index
    %c0_18 = arith.constant 0 : index
    %c0_19 = arith.constant 0 : index
    %25 = vector.load %arg3[%c0_16, %c1_17, %c0_18, %c0_19] : memref<1x2x8x256xf32, #tpu.memory_space<vmem>>, vector<1x1x8x256xf32>
    %26 = vector.shape_cast %25 : vector<1x1x8x256xf32> to vector<8x256xf32>
    %27 = vector.shape_cast %24 : vector<8x256xf32> to vector<1x1x8x256xf32>
    tpu.vector_store %arg3[%c0_16, %c1_17, %c0_18, %c0_19], %27 {strides = array<i32>} : memref<1x2x8x256xf32, #tpu.memory_space<vmem>>, vector<1x1x8x256xf32>,
    return
  }
  func.func @transform_0(%arg0: i32, %arg1: i32) -> (i32, i32) {
    %c1_i32 = arith.constant 1 : i32
    %0 = arith.muli %arg0, %c1_i32 : i32
    %1 = arith.addi %0, %arg1 : i32
    %c0_i32 = arith.constant 0 : i32
    %c0_i32_0 = arith.constant 0 : i32
    return %1, %c0_i32 : i32, i32
  }
  func.func @transform_1(%arg0: i32, %arg1: i32) -> (i32, i32, i32, i32) {
    %c0_i32 = arith.constant 0 : i32
    %c0_i32_0 = arith.constant 0 : i32
    %c0_i32_1 = arith.constant 0 : i32
    %c0_i32_2 = arith.constant 0 : i32
    return %arg0, %c0_i32, %c0_i32_0, %c0_i32_1 : i32, i32, i32, i32
  }
}

</mosaic_0001>

<llo_original>
// kernel: tpu_custom_call.1
$region0: #{tpu_custom_call.1}
  #allocation0 [shape = 'u32[]', space=smem, size = 0x4, offset = 0x4, fixed_abs, tag = 'smem constant byte address 0x4 - core index']
  #allocation1 [shape = 'u32[144,128]{1,0:T(1,128)}', space=vmem, size = 0x12000, scoped, tag = 'internal scratch']
  %s0 = inlined_call_operand.hbm [shape: f32[16,256], index: 0, kind: input, shape index: {}]
  %s1 = inlined_call_operand.hbm [shape: f32[2,2,8,256], index: 1, kind: output, shape index: {}]
  %s2 = sld [smem:[#allocation0]]
  $region45: #{tpu_custom_call.1} parent=0
    _
  %s4 = ssub.s32 1, %s2
  %s5 = scalar_select 0, %s4, %s2
  $region1: #{tpu_custom_call.1} parent=0
    #allocation2 [shape = 'u8[16384]{0}', space=vmem, size = 0x4000, scoped, tag = 'input window, operand 0']
    #allocation3 [shape = 's32[2]{0}', space=sflag, size = 0x8, scoped, tag = 'scoped memory for tpu_custom_call.1']
    #allocation4 [shape = 's32[2]{0}', space=sflag, size = 0x8, scoped, tag = 'scoped memory for tpu_custom_call.1']
    #allocation5 [shape = 'u8[32768]{0}', space=vmem, size = 0x8000, scoped, tag = 'output window, operand 0']
    %6 = vsyncpa [#allocation3], 0
    %s7 = scalar_lea.sflag [#allocation3], 1
    %8 = vsyncpa %s7, 0
    %9 = vsyncpa [#allocation4], 0
    %s10 = scalar_lea.sflag [#allocation4], 1
    %11 = vsyncpa %s10, 0
    loop: start=0, step=1, limit=4
    $region2: #{tpu_custom_call.1} parent=1 // loop_pre_header
      _
    $region3: #{tpu_custom_call.1} parent=1 // loop_header
      %s13 = sphi 0, %s17
      %p14 = scmp.ge.s32.totalorder %s13, 4
      %s20 = sphi 0, %s32
      %s21 = sphi 0, %s28
      %s22 = sphi 0, %s20
      %s23 = sphi 0, %s21
      %s24 = sphi 0, %s22
      %s25 = sphi 0, %s23
      %s37 = sphi 0, %s39
      %s40 = sphi 0, %s37
      %s41 = sphi 0, %s40
      %s57 = sphi 0, %s41
      %s63 = sphi 0, %s65
      %s66 = sphi 0, %s63
      %s67 = sphi 0, %s66
      %s83 = sphi 0, %s67
    $region4: #{tpu_custom_call.1} parent=1 // loop_header_branch
      %16 = sbr.rel (%p14) target = $region8
    $region5: #{tpu_custom_call.1} parent=1 // loop_body
      %s18 = ssub.s32 %s13, 1
      %s19 = ssub.s32 %s13, 2
      %s26 = sadd.s32 1, %s21
      %p27 = scmp.ge.s32.totalorder %s26, 1
      %s28 = scalar_select %p27, 0, %s26
      %s29 = sadd.s32 1, %s20
      %s30 = scalar_select %p27, %s29, %s20
      %p31 = scmp.ge.s32.totalorder %s30, 2
      %s32 = scalar_select %p31, 0, %s30
      %s33 = sadd.s32 %s20, %s21
      %s34 = sadd.s32 %s32, %s28
      %s35 = ssub.s32 %s33, %s34
      %p36 = scmp.eq.s32.totalorder %s35, 0
      %s38 = sadd.s32 %s37, 1
      %s39 = scalar_select %p36, %s37, %s38
      %p42 = pneg %p36
      %p43 = scmp.eq.s32.totalorder %s13, 1
      %p44 = por %p42, %p43
      %p45 = scmp.ne.s32.totalorder %s37, %s40
      %p46 = scmp.eq.s32.totalorder %s13, 0
      %p47 = por %p45, %p46
      %p48 = scmp.ne.s32.totalorder %s37, %s40
      %p49 = scmp.eq.s32.totalorder %s18, 1
      %p50 = por %p48, %p49
      %p51 = scmp.ne.s32.totalorder %s40, %s41
      %p52 = scmp.eq.s32.totalorder %s18, 0
      %p53 = por %p51, %p52
      %p54 = scmp.ne.s32.totalorder %s40, %s41
      %p55 = scmp.eq.s32.totalorder %s19, 1
      %p56 = por %p54, %p55
      %p58 = scmp.ne.s32.totalorder %s41, %s57
      %p59 = scmp.eq.s32.totalorder %s19, 0
      %p60 = por %p58, %p59
      %s61 = ssub.s32 %s20, %s32
      %p62 = scmp.eq.s32.totalorder %s61, 0
      %s64 = sadd.s32 %s63, 1
      %s65 = scalar_select %p62, %s63, %s64
      %p68 = pneg %p62
      %p69 = scmp.eq.s32.totalorder %s13, 1
      %p70 = por %p68, %p69
      %p71 = scmp.ne.s32.totalorder %s63, %s66
      %p72 = scmp.eq.s32.totalorder %s13, 0
      %p73 = por %p71, %p72
      %p74 = scmp.ne.s32.totalorder %s63, %s66
      %p75 = scmp.eq.s32.totalorder %s18, 1
      %p76 = por %p74, %p75
      %p77 = scmp.ne.s32.totalorder %s66, %s67
      %p78 = scmp.eq.s32.totalorder %s18, 0
      %p79 = por %p77, %p78
      %p80 = scmp.ne.s32.totalorder %s66, %s67
      %p81 = scmp.eq.s32.totalorder %s19, 1
      %p82 = por %p80, %p81
      %p84 = scmp.ne.s32.totalorder %s67, %s83
      %p85 = scmp.eq.s32.totalorder %s19, 0
      %p86 = por %p84, %p85
      %p87 = scmp.le.s32.totalorder 1, %s13
      %p88 = scmp.lt.s32.totalorder %s13, 3
      %p89 = pnand %p87, %p88
      %p90 = pneg %p89
      // Predicated region
      $region9: #{tpu_custom_call.1} parent=5 // pred_check
        _
      $region10: #{tpu_custom_call.1} parent=5 // pred_check_branch
        %92 = sbr.rel (%p89) target = $region12
      $region11: #{tpu_custom_call.1} parent=5 // pred_region
        %s93 = ssub.s32 %s13, 1
      $region12: #{tpu_custom_call.1} parent=5 // pred_fallthru
        _
      %p94 = scmp.lt.s32.totalorder %s13, 2
      // Predicated region
      $region13: #{tpu_custom_call.1} parent=5 // pred_check
        %p95 = pneg %p94
      $region14: #{tpu_custom_call.1} parent=5 // pred_check_branch
        %97 = sbr.rel (%p95) target = $region16
      $region15: #{tpu_custom_call.1} parent=5 // pred_region
        // Predicated region
        $region17: #{tpu_custom_call.1} parent=15 // pred_check
          %p98 = pneg %p47
        $region18: #{tpu_custom_call.1} parent=15 // pred_check_branch
          %100 = sbr.rel (%p98) target = $region20
        $region19: #{tpu_custom_call.1} parent=15 // pred_region
          %s101 = sand.u32 %s37, 1
          %s102 = scalar_lea.sflag [#allocation3], %s101
          %s103 = sand.u32 %s37, 1
          %s104 = smul.addr %s103, 16
          %s105 = scalar_lea.vmem [#allocation2], %s104
          %s106 = sadd.s32 %s20, %s21
          %s108 = ssub.s32 256, 256
          %109 = vsyncadd %s102, %s108
          %s110 = smul.addr %s106, 2
          %s111 = smul.addr %s110, 128
          %s112 = scalar_lea.hbm %s0, %s111
          %s114 = sshll.u32 %s105, 4
          %s115 = int_to_ptr.vmem [resolvable:$true] %s114
          %117 = dma.hbm_to_vmem [thread:$0]  %s112, 256, %s115, %s102
        $region20: #{tpu_custom_call.1} parent=15 // pred_fallthru
          _
      $region16: #{tpu_custom_call.1} parent=5 // pred_fallthru
        _
      %p118 = scmp.le.s32.totalorder 1, %s13
      %p119 = scmp.lt.s32.totalorder %s13, 3
      %p120 = pnand %p118, %p119
      %p121 = pneg %p120
      // Predicated region
      $region21: #{tpu_custom_call.1} parent=5 // pred_check
        _
      $region22: #{tpu_custom_call.1} parent=5 // pred_check_branch
        %123 = sbr.rel (%p120) target = $region24
      $region23: #{tpu_custom_call.1} parent=5 // pred_region
        %s124 = ssub.s32 %s13, 1
        %s125 = sand.u32 %s40, 1
        %s126 = scalar_lea.sflag [#allocation3], %s125
        %s127 = sand.u32 %s40, 1
        %s128 = smul.addr %s127, 16
        %s129 = scalar_lea.vmem [#allocation2], %s128
        // Predicated region
        $region25: #{tpu_custom_call.1} parent=23 // pred_check
          %p130 = pneg %p53
        $region26: #{tpu_custom_call.1} parent=23 // pred_check_branch
          %132 = sbr.rel (%p130) target = $region28
        $region27: #{tpu_custom_call.1} parent=23 // pred_region
          %133 = dma.done %s126, 256
        $region28: #{tpu_custom_call.1} parent=23 // pred_fallthru
          _
        %s134 = sand.u32 %s40, 1
        %s135 = scalar_lea.sflag [#allocation3], %s134
        %s136 = sand.u32 %s40, 1
        %s137 = smul.addr %s136, 16
        %s138 = scalar_lea.vmem [#allocation2], %s137
        %p139 = pneg %p53
        %p140 = pneg %p50
        %p141 = pneg %p79
        %p142 = pneg %p76
        %s143 = sand.u32 %s66, 1
        %s144 = scalar_lea.sflag [#allocation4], %s143
        %s145 = sand.u32 %s66, 1
        %s146 = smul.addr %s145, 32
        %s147 = scalar_lea.vmem [#allocation5], %s146
        %s148 = sadd.s32 %s22, %s23
        %p149 = scmp.eq.s32.totalorder %s23, 0
        // Predicated region
        $region29: #{tpu_custom_call.1} parent=23 // pred_check
          %p150 = pneg %p149
        $region30: #{tpu_custom_call.1} parent=23 // pred_check_branch
          %152 = sbr.rel (%p150) target = $region32
        $region31: #{tpu_custom_call.1} parent=23 // pred_region
          %153 = vst [vmem:[%s147] sm:$0xff] 0.0
          %154 = vst [vmem:[%s147 + $0x8] sm:$0xff] 0.0
          %155 = vst [vmem:[%s147 + $0x10] sm:$0xff] 0.0
          %156 = vst [vmem:[%s147 + $0x18] sm:$0xff] 0.0
        $region32: #{tpu_custom_call.1} parent=23 // pred_fallthru
          _
        %v157 = vld [vmem:[%s129] sm:$0xff]
        %v158 = vld [vmem:[%s129 + $0x8] sm:$0xff]
        %vm159 = vcmp.le.f32.partialorder %v157, 0.05
        %vm160 = vcmp.le.f32.partialorder %v158, 0.05
        %v161 = vsel %vm159, 1, 0
        %v162 = vsel %vm160, 1, 0
        %v163 = vcvt.s32.f32 %v161
        %v164 = vcvt.s32.f32 %v162
        %v165 = vadd.f32 %v163, 0.0
        %v166 = vadd.f32 %v164, 0.0
        %vm167 = vcmp.le.f32.partialorder %v157, 0.3
        %vm168 = vcmp.le.f32.partialorder %v158, 0.3
        %v169 = vsel %vm167, 1, 0
        %v170 = vsel %vm168, 1, 0
        %v171 = vcvt.s32.f32 %v169
        %v172 = vcvt.s32.f32 %v170
        %v173 = vadd.f32 %v171, 0.0
        %v174 = vadd.f32 %v172, 0.0
        %v175 = vld [vmem:[%s147] sm:$0xff]
        %v176 = vld [vmem:[%s147 + $0x8] sm:$0xff]
        %v177 = vadd.f32 %v175, %v165
        %v178 = vadd.f32 %v176, %v166
        %179 = vst [vmem:[%s147] sm:$0xff] %v177
        %180 = vst [vmem:[%s147 + $0x8] sm:$0xff] %v178
        %s181 = scalar_lea.vmem %s147, 16 [#allocation5]
        %v182 = vld [vmem:[%s181] sm:$0xff]
        %v183 = vld [vmem:[%s181 + $0x8] sm:$0xff]
        %v184 = vadd.f32 %v182, %v173
        %v185 = vadd.f32 %v183, %v174
        %186 = vst [vmem:[%s181] sm:$0xff] %v184
        %187 = vst [vmem:[%s181 + $0x8] sm:$0xff] %v185
        %s188 = sand.u32 %s66, 1
        %s189 = scalar_lea.sflag [#allocation4], %s188
        %s190 = sand.u32 %s66, 1
        %s191 = smul.addr %s190, 32
        %s192 = scalar_lea.vmem [#allocation5], %s191
        // Predicated region
        $region33: #{tpu_custom_call.1} parent=23 // pred_check
          %p193 = pneg %p76
        $region34: #{tpu_custom_call.1} parent=23 // pred_check_branch
          %195 = sbr.rel (%p193) target = $region36
        $region35: #{tpu_custom_call.1} parent=23 // pred_region
          %s197 = ssub.s32 512, 512
          %198 = vsyncadd %s189, %s197
          %s199 = smul.addr %s22, 4
          %s200 = smul.addr %s199, 128
          %s201 = scalar_lea.hbm %s1, %s200
          %s202 = sshll.u32 %s192, 4
          %s203 = int_to_ptr.vmem [resolvable:$true] %s202
          %208 = dma.vmem_to_hbm [thread:$0]  %s203, 512, %s201, %s189, 256, 256, 16
        $region36: #{tpu_custom_call.1} parent=23 // pred_fallthru
          _
      $region24: #{tpu_custom_call.1} parent=5 // pred_fallthru
        _
      %p209 = scmp.le.s32.totalorder 2, %s13
      // Predicated region
      $region37: #{tpu_custom_call.1} parent=5 // pred_check
        %p210 = pneg %p209
      $region38: #{tpu_custom_call.1} parent=5 // pred_check_branch
        %212 = sbr.rel (%p210) target = $region40
      $region39: #{tpu_custom_call.1} parent=5 // pred_region
        %s213 = ssub.s32 %s13, 2
        // Predicated region
        $region41: #{tpu_custom_call.1} parent=39 // pred_check
          %p214 = pneg %p82
        $region42: #{tpu_custom_call.1} parent=39 // pred_check_branch
          %216 = sbr.rel (%p214) target = $region44
        $region43: #{tpu_custom_call.1} parent=39 // pred_region
          %s217 = sand.u32 %s67, 1
          %s218 = scalar_lea.sflag [#allocation4], %s217
          %s219 = sand.u32 %s67, 1
          %s220 = smul.addr %s219, 32
          %s221 = scalar_lea.vmem [#allocation5], %s220
          %222 = dma.done %s218, 512
        $region44: #{tpu_custom_call.1} parent=39 // pred_fallthru
          _
      $region40: #{tpu_custom_call.1} parent=5 // pred_fallthru
        _
    $region6: #{tpu_custom_call.1} parent=1 // loop_footer
      %s17 = sadd.s32 1, %s13
    $region7: #{tpu_custom_call.1} parent=1 // loop_footer_branch
      %12 = sbr.rel target = $region3
    $region8: #{tpu_custom_call.1} parent=1 // loop_exit
      _
    %223 = vsyncpa [#allocation3], 1
    %s224 = scalar_lea.sflag [#allocation3], 1
    %225 = vsyncpa %s224, 1
    %226 = vsyncpa [#allocation4], 1
    %s227 = scalar_lea.sflag [#allocation4], 1
    %228 = vsyncpa %s227, 1

</llo_original>
